<compile_context>
chip_gen: v7x
topology: tpu7x:2x2x1
jax: 0.10.0
libtpu: 0.0.40
codegen_flags: <defaults>
</compile_context>

<pallas_src>
import functools

import jax
import jax.numpy as jnp
from jax.experimental import pallas as pl
from jax.experimental.pallas import tpu as pltpu

_F32_MAX = float(jnp.finfo(jnp.float32).max)
_LANE_CANDIDATES = (1024, 512, 256, 128)   # multiples of 128, largest first
_TARGET_TILE_ELEMS = 1024 * 512            # ~2 MiB of f32 per operand per buffer
_VMEM_LIMIT_BYTES = 32 * 1024 * 1024       # masked path: 4 ops x 2 bufs x 2 MiB = 16 MiB live


def _round_up(x, m):
    return -(-x // m) * m


def _kernel_masked(z_ref, mask_ref, z0_ref, out_ref, *, z_range):
    z = z_ref[...]
    if z_range is not None:
        # torch.min(torch.max(Z, -finfo.max), finfo.max); VPU slack -> free.
        z = jnp.minimum(jnp.maximum(z, -_F32_MAX), _F32_MAX)
    m = mask_ref[...].astype(z.dtype)          # mask may be f32 / bf16 / int8 / bool
    z0 = z0_ref[...]
    z = z0 + m * (z - z0)                      # == m*z + (1-m)*z0, one fewer VPU op
    if z_range is not None:
        out_ref[...] = (z_range * jnp.tanh(z)).astype(out_ref.dtype)
    else:
        out_ref[...] = z.astype(out_ref.dtype)


def _kernel_nomask(z_ref, out_ref, *, z_range):
    # Only reached when z_range is not None (the identity path never launches a kernel).
    z = z_ref[...]
    z = jnp.minimum(jnp.maximum(z, -_F32_MAX), _F32_MAX)
    out_ref[...] = (z_range * jnp.tanh(z)).astype(out_ref.dtype)


def _choose_layout(total):
    """Return (lanes, padded_total).  padded_total == total (zero-copy reshape)
    whenever `total` has a multiple-of-128 divisor; otherwise minimally pad."""
    # Prefer a factorization with >= 8 rows (full sublane use), largest lanes first.
    for lanes in _LANE_CANDIDATES:
        if total % lanes == 0 and total // lanes >= 8:
            return lanes, total
    for lanes in _LANE_CANDIDATES:
        if total % lanes == 0:
            return lanes, total
    # Fallback: pad the flat tail up to the next multiple of 128 (<= 127 extra elems).
    return 128, _round_up(total, 128)


def optimizable_z_forward(Z, mask=None, initial_pre_tanh_Z=None, Z_range=None):
    """Pallas implementation of Optimizable_Z.forward().

    Z:                   (N, C, H, W) float32 parameter tensor.
    mask:                same shape, any numeric dtype (upcast in-kernel), or None.
    initial_pre_tanh_Z:  same shape float32 (required if mask is not None).
    Z_range:             python float or None.
    """
    use_mask = mask is not None

    # Identity path: no clamp, no blend, no tanh -> no kernel launch.
    if not use_mask and Z_range is None:
        return Z

    orig_shape = Z.shape
    total = Z.size
    lanes, padded_total = _choose_layout(total)
    rows = padded_total // lanes

    # Row tile: ~2 MiB per operand per buffer, multiple of 8; for rows > 8 also
    # capped so the grid has >= 2 steps (shards across both v7x TensorCores).
    if rows <= 8:
        row_tile = rows                                   # full extent, grid = 1
    else:
        row_tile = max(8, (_TARGET_TILE_ELEMS // lanes) // 8 * 8)
        row_tile = min(row_tile, _round_up(-(-rows // 2), 8))
    grid = (pl.cdiv(rows, row_tile),)                     # partial last block OK

    def _to_2d(x):
        if padded_total == total:
            return x.reshape(rows, lanes)                 # zero-copy (bitcast) reshape
        flat = x.reshape(-1)
        return jnp.pad(flat, (0, padded_total - total)).reshape(rows, lanes)

    spec = pl.BlockSpec((row_tile, lanes), lambda i: (i, 0))

    z2d = _to_2d(Z)
    if use_mask:
        kernel = functools.partial(_kernel_masked, z_range=Z_range)
        operands = (z2d, _to_2d(mask), _to_2d(initial_pre_tanh_Z))
        in_specs = [spec, spec, spec]
    else:
        kernel = functools.partial(_kernel_nomask, z_range=Z_range)
        operands = (z2d,)
        in_specs = [spec]

    out2d = pl.pallas_call(
        kernel,
        out_shape=jax.ShapeDtypeStruct((rows, lanes), Z.dtype),
        grid_spec=pltpu.PrefetchScalarGridSpec(
            num_scalar_prefetch=0,
            grid=grid,
            in_specs=in_specs,
            out_specs=spec,
        ),
        compiler_params=pltpu.CompilerParams(
            dimension_semantics=("parallel",),
            vmem_limit_bytes=_VMEM_LIMIT_BYTES),
    )(*operands)

    if padded_total == total:
        return out2d.reshape(orig_shape)
    return out2d.reshape(-1)[:total].reshape(orig_shape)


def _reference_forward(Z, mask, initial_pre_tanh_Z, Z_range):
    """Plain-JAX reference mirroring the PyTorch forward()."""
    z = Z
    if Z_range is not None:
        z = jnp.minimum(jnp.maximum(z, -_F32_MAX), _F32_MAX)
    if mask is not None:
        z = mask.astype(z.dtype) * z + (1.0 - mask.astype(z.dtype)) * initial_pre_tanh_Z
    if Z_range is not None:
        return Z_range * jnp.tanh(z)
    return z


def _run_case(key, shape, Z_range, use_mask, binary_mask=True):
    k_init, k_z, k_mask = jax.random.split(key, 3)
    initial_pre_tanh_Z = jax.random.normal(k_init, shape, dtype=jnp.float32)
    # Mirror __init__: Z starts as zeros, then Z[:initial.size(0)] = initial_pre_tanh_Z,
    # then perturb so the mask blend is non-trivial.
    Z = jnp.zeros(shape, dtype=jnp.float32)
    Z = Z.at[: initial_pre_tanh_Z.shape[0]].set(initial_pre_tanh_Z)
    Z = Z + 0.5 * jax.random.normal(k_z, shape, dtype=jnp.float32)
    if use_mask:
        u = jax.random.uniform(k_mask, shape)
        mask = (u > 0.5).astype(jnp.float32) if binary_mask else u.astype(jnp.float32)
    else:
        mask = None
        initial_pre_tanh_Z = None
    out = jax.block_until_ready(
        optimizable_z_forward(Z, mask, initial_pre_tanh_Z, Z_range))
    ref = _reference_forward(Z, mask, initial_pre_tanh_Z, Z_range)
    assert out.shape == shape and out.dtype == jnp.float32
    assert jnp.allclose(out, ref, atol=1e-5, rtol=1e-5)
    return Z


if __name__ == "__main__":
    key = jax.random.PRNGKey(0)
    keys = jax.random.split(key, 6)

    # 1) Canonical small shape (2,4,16,16): zero-copy layout, mask + Z_range.
    _run_case(keys[0], (2, 4, 16, 16), Z_range=1.0, use_mask=True)

    # 2) mask, no Z_range (no clamp / tanh), fractional mask.
    _run_case(keys[1], (2, 4, 16, 16), Z_range=None, use_mask=True, binary_mask=False)

    # 3) no mask, Z_range (single-input kernel variant).
    _run_case(keys[2], (2, 4, 16, 16), Z_range=0.8, use_mask=False)

    # 4) no mask, no Z_range -> identity, no kernel launch.
    Zp = jax.random.normal(keys[3], (2, 4, 16, 16), dtype=jnp.float32)
    out_plain = jax.block_until_ready(optimizable_z_forward(Zp))
    assert jnp.allclose(out_plain, Zp)

    # 5) Larger zero-copy shape -> grid of 2 parallel steps (v7x dual-TC path).
    _run_case(keys[4], (2, 8, 32, 32), Z_range=1.0, use_mask=True)

    # 6) Shape whose size is NOT a multiple of 128 -> minimal-pad fallback +
    #    partial last output block (masked write).
    _run_case(keys[5], (2, 3, 20, 20), Z_range=1.0, use_mask=True)

    print("KERNEL_OK")
</pallas_src>

<mosaic_0001>
module attributes {stable_mosaic.version = 11 : i64} {
  func.func @_kernel_masked(%arg0: i32, %arg1: memref<8x256xf32, #tpu.memory_space<vmem>>, %arg2: memref<8x256xf32, #tpu.memory_space<vmem>>, %arg3: memref<8x256xf32, #tpu.memory_space<vmem>>, %arg4: memref<8x256xf32, #tpu.memory_space<vmem>>) attributes {dimension_semantics = [#tpu.dimension_semantics<parallel>], iteration_bounds = array<i64: 1>, scalar_prefetch = 0 : i64, scratch_operands = 0 : i64, tpu.core_type = #tpu.core_type<tc>, window_params = [{transform_indices = @transform_0, window_bounds = array<i64: 8, 256>}, {transform_indices = @transform_1, window_bounds = array<i64: 8, 256>}, {transform_indices = @transform_2, window_bounds = array<i64: 8, 256>}, {transform_indices = @transform_3, window_bounds = array<i64: 8, 256>}]} {
    %c0 = arith.constant 0 : index
    %c0_0 = arith.constant 0 : index
    %0 = vector.load %arg1[%c0, %c0_0] : memref<8x256xf32, #tpu.memory_space<vmem>>, vector<8x256xf32>
    %cst = arith.constant -3.40282347E+38 : f32
    %1 = vector.broadcast %cst : f32 to vector<8x256xf32>
    %2 = arith.maximumf %0, %1 : vector<8x256xf32>
    %cst_1 = arith.constant 3.40282347E+38 : f32
    %3 = vector.broadcast %cst_1 : f32 to vector<8x256xf32>
    %4 = arith.minimumf %2, %3 : vector<8x256xf32>
    %c0_2 = arith.constant 0 : index
    %c0_3 = arith.constant 0 : index
    %5 = vector.load %arg2[%c0_2, %c0_3] : memref<8x256xf32, #tpu.memory_space<vmem>>, vector<8x256xf32>
    %c0_4 = arith.constant 0 : index
    %c0_5 = arith.constant 0 : index
    %6 = vector.load %arg3[%c0_4, %c0_5] : memref<8x256xf32, #tpu.memory_space<vmem>>, vector<8x256xf32>
    %7 = arith.subf %4, %6 : vector<8x256xf32>
    %8 = arith.mulf %5, %7 : vector<8x256xf32>
    %9 = arith.addf %6, %8 : vector<8x256xf32>
    %10 = math.tanh %9 : vector<8x256xf32>
    %cst_6 = arith.constant 1.000000e+00 : f32
    %11 = vector.broadcast %cst_6 : f32 to vector<8x256xf32>
    %12 = arith.mulf %11, %10 : vector<8x256xf32>
    %c0_7 = arith.constant 0 : index
    %c0_8 = arith.constant 0 : index
    %13 = vector.load %arg4[%c0_7, %c0_8] : memref<8x256xf32, #tpu.memory_space<vmem>>, vector<8x256xf32>
    tpu.vector_store %arg4[%c0_7, %c0_8], %12 {strides = array<i32>} : memref<8x256xf32, #tpu.memory_space<vmem>>, vector<8x256xf32>,
    return
  }
  func.func @transform_0(%arg0: i32) -> (i32, i32) {
    %c0_i32 = arith.constant 0 : i32
    %c0_i32_0 = arith.constant 0 : i32
    return %arg0, %c0_i32 : i32, i32
  }
  func.func @transform_1(%arg0: i32) -> (i32, i32) {
    %c0_i32 = arith.constant 0 : i32
    %c0_i32_0 = arith.constant 0 : i32
    return %arg0, %c0_i32 : i32, i32
  }
  func.func @transform_2(%arg0: i32) -> (i32, i32) {
    %c0_i32 = arith.constant 0 : i32
    %c0_i32_0 = arith.constant 0 : i32
    return %arg0, %c0_i32 : i32, i32
  }
  func.func @transform_3(%arg0: i32) -> (i32, i32) {
    %c0_i32 = arith.constant 0 : i32
    %c0_i32_0 = arith.constant 0 : i32
    return %arg0, %c0_i32 : i32, i32
  }
}

</mosaic_0001>

<llo_original>
// kernel: tpu_custom_call.1
$region0: #{tpu_custom_call.1}
  #allocation0 [shape = 'u32[]', space=smem, size = 0x4, offset = 0x4, fixed_abs, tag = 'smem constant byte address 0x4 - core index']
  #allocation1 [shape = 'u32[144,128]{1,0:T(1,128)}', space=vmem, size = 0x12000, scoped, tag = 'internal scratch']
  %s0 = inlined_call_operand.hbm [shape: f32[8,256], index: 0, kind: input, shape index: {}]
  %s1 = inlined_call_operand.hbm [shape: f32[8,256], index: 1, kind: input, shape index: {}]
  %s2 = inlined_call_operand.hbm [shape: f32[8,256], index: 2, kind: input, shape index: {}]
  %s3 = inlined_call_operand.hbm [shape: f32[8,256], index: 3, kind: output, shape index: {}]
  %s4 = sld [smem:[#allocation0]]
  $region34: #{tpu_custom_call.1} parent=0
    _
  %s6 = ssub.s32 1, %s4
  %s7 = scalar_select 0, %s6, %s4
  $region1: #{tpu_custom_call.1} parent=0
    #allocation2 [shape = 'u8[8192]{0}', space=vmem, size = 0x2000, scoped, tag = 'input window, operand 0, single buffered']
    #allocation3 [shape = 's32[1]{0}', space=sflag, size = 0x4, scoped, tag = 'scoped memory for tpu_custom_call.1']
    #allocation4 [shape = 's32[1]{0}', space=sflag, size = 0x4, scoped, tag = 'scoped memory for tpu_custom_call.1']
    #allocation5 [shape = 'u8[8192]{0}', space=vmem, size = 0x2000, scoped, tag = 'input window, operand 1, single buffered']
    #allocation6 [shape = 's32[1]{0}', space=sflag, size = 0x4, scoped, tag = 'scoped memory for tpu_custom_call.1']
    #allocation7 [shape = 'u8[8192]{0}', space=vmem, size = 0x2000, scoped, tag = 'input window, operand 2, single buffered']
    #allocation8 [shape = 'u8[8192]{0}', space=vmem, size = 0x2000, scoped, tag = 'output window, operand 0, single buffered']
    %8 = vsyncpa [#allocation3], 0
    %9 = vsyncpa [#allocation6], 0
    %10 = vsyncpa [#allocation4], 0
    // Predicated region
    $region2: #{tpu_custom_call.1} parent=1 // pred_check
      _
    $region3: #{tpu_custom_call.1} parent=1 // pred_check_branch
      %12 = sbr.rel (0) target = $region5
    $region4: #{tpu_custom_call.1} parent=1 // pred_region
      %s14 = ssub.s32 256, 256
      %15 = vsyncadd [#allocation3], %s14
      %s17 = sshll.u32 [#allocation2], 4
      %s18 = int_to_ptr.vmem [resolvable:$true] %s17
      %20 = dma.hbm_to_vmem [thread:$0]  %s0, 256, %s18, [#allocation3]
    $region5: #{tpu_custom_call.1} parent=1 // pred_fallthru
      _
    // Predicated region
    $region6: #{tpu_custom_call.1} parent=1 // pred_check
      _
    $region7: #{tpu_custom_call.1} parent=1 // pred_check_branch
      %22 = sbr.rel (0) target = $region9
    $region8: #{tpu_custom_call.1} parent=1 // pred_region
      %s24 = ssub.s32 256, 256
      %25 = vsyncadd [#allocation6], %s24
      %s27 = sshll.u32 [#allocation5], 4
      %s28 = int_to_ptr.vmem [resolvable:$true] %s27
      %30 = dma.hbm_to_vmem [thread:$0]  %s1, 256, %s28, [#allocation6]
    $region9: #{tpu_custom_call.1} parent=1 // pred_fallthru
      _
    // Predicated region
    $region10: #{tpu_custom_call.1} parent=1 // pred_check
      _
    $region11: #{tpu_custom_call.1} parent=1 // pred_check_branch
      %32 = sbr.rel (0) target = $region13
    $region12: #{tpu_custom_call.1} parent=1 // pred_region
      %s34 = ssub.s32 256, 256
      %35 = vsyncadd [#allocation6], %s34
      %s37 = sshll.u32 [#allocation7], 4
      %s38 = int_to_ptr.vmem [resolvable:$true] %s37
      %40 = dma.hbm_to_vmem [thread:$0]  %s2, 256, %s38, [#allocation6]
    $region13: #{tpu_custom_call.1} parent=1 // pred_fallthru
      _
    // Predicated region
    $region14: #{tpu_custom_call.1} parent=1 // pred_check
      _
    $region15: #{tpu_custom_call.1} parent=1 // pred_check_branch
      %42 = sbr.rel (0) target = $region17
    $region16: #{tpu_custom_call.1} parent=1 // pred_region
      %43 = dma.done [#allocation3], 256
    $region17: #{tpu_custom_call.1} parent=1 // pred_fallthru
      _
    // Predicated region
    $region18: #{tpu_custom_call.1} parent=1 // pred_check
      _
    $region19: #{tpu_custom_call.1} parent=1 // pred_check_branch
      %45 = sbr.rel (0) target = $region21
    $region20: #{tpu_custom_call.1} parent=1 // pred_region
      %46 = dma.done [#allocation6], 256
    $region21: #{tpu_custom_call.1} parent=1 // pred_fallthru
      _
    // Predicated region
    $region22: #{tpu_custom_call.1} parent=1 // pred_check
      _
    $region23: #{tpu_custom_call.1} parent=1 // pred_check_branch
      %48 = sbr.rel (0) target = $region25
    $region24: #{tpu_custom_call.1} parent=1 // pred_region
      %49 = dma.done [#allocation6], 256
    $region25: #{tpu_custom_call.1} parent=1 // pred_fallthru
      _
    %v50 = vld [vmem:[#allocation2] sm:$0xff]
    %v51 = vld [vmem:[#allocation2 + $0x8] sm:$0xff]
    %v52 = vmax.f32 %v50, -3.4028235e+38
    %v53 = vmax.f32 %v51, -3.4028235e+38
    %v54 = vmin.f32 %v52, 3.4028235e+38
    %v55 = vmin.f32 %v53, 3.4028235e+38
    %v56 = vld [vmem:[#allocation5] sm:$0xff]
    %v57 = vld [vmem:[#allocation5 + $0x8] sm:$0xff]
    %v58 = vld [vmem:[#allocation7] sm:$0xff]
    %v59 = vld [vmem:[#allocation7 + $0x8] sm:$0xff]
    %v60 = vsub.f32 %v54, %v58
    %v61 = vsub.f32 %v55, %v59
    %v62 = vmul.f32 %v56, %v60
    %v63 = vmul.f32 %v57, %v61
    %v64 = vadd.f32 %v58, %v62
    %v65 = vadd.f32 %v59, %v63
    %v66 = vtanh.pop %v64
    %v67 = vtanh.pop %v65
    %68 = vst [vmem:[#allocation8] sm:$0xff] %v66
    %69 = vst [vmem:[#allocation8 + $0x8] sm:$0xff] %v67
    // Predicated region
    $region26: #{tpu_custom_call.1} parent=1 // pred_check
      _
    $region27: #{tpu_custom_call.1} parent=1 // pred_check_branch
      %71 = sbr.rel (0) target = $region29
    $region28: #{tpu_custom_call.1} parent=1 // pred_region
      %s73 = ssub.s32 256, 256
      %74 = vsyncadd [#allocation4], %s73
      %s76 = sshll.u32 [#allocation8], 4
      %s77 = int_to_ptr.vmem [resolvable:$true] %s76
      %79 = dma.vmem_to_hbm [thread:$0]  %s77, 256, %s3, [#allocation4]
    $region29: #{tpu_custom_call.1} parent=1 // pred_fallthru
      _
    // Predicated region
    $region30: #{tpu_custom_call.1} parent=1 // pred_check
      _
    $region31: #{tpu_custom_call.1} parent=1 // pred_check_branch
      %81 = sbr.rel (0) target = $region33
    $region32: #{tpu_custom_call.1} parent=1 // pred_region
      %82 = dma.done [#allocation4], 256
    $region33: #{tpu_custom_call.1} parent=1 // pred_fallthru
      _
    %83 = vsyncpa [#allocation3], 1
    %84 = vsyncpa [#allocation6], 1
    %85 = vsyncpa [#allocation4], 1

</llo_original>
